<compile_context>
chip_gen: v7x
topology: tpu7x:2x2x1
jax: 0.10.0
libtpu: 0.0.40
codegen_flags: <defaults>
</compile_context>

<pallas_src>
import functools

import jax
import jax.numpy as jnp
from jax import lax
from jax.experimental import pallas as pl
from jax.experimental.pallas import tpu as pltpu


def _round_up(x, m):
    return ((x + m - 1) // m) * m


def value_net_kernel(x_ref, w1_ref, b1_ref, w2_ref, b2_ref,
                     w3_ref, b3_ref, w4t_ref, b4_ref, o_ref,
                     *, state_transposed):
    # Weights w_i: (out, in) (PyTorch nn.Linear layout); biases b_i: (out, 1);
    # w4t: (H4, 1). Activations are (features, TILE_B): batch on the 128-lane
    # axis -> lane-dense matmul outputs and a lane-dense final store.
    mm_dtype = w1_ref.dtype                  # bf16 or f32 matmul-operand dtype
    x = x_ref[...].astype(mm_dtype)

    if state_transposed:
        # x: (S, TILE_B) -> native (H, S) @ (S, TILE_B) on the MXU.
        h = jnp.dot(w1_ref[...], x, preferred_element_type=jnp.float32)
    else:
        # x: (TILE_B, S); transposed-RHS contraction keeps the state in its
        # natural HBM layout (no wrapper transpose pass over the batch).
        h = lax.dot_general(w1_ref[...], x,
                            (((1,), (1,)), ((), ())),
                            preferred_element_type=jnp.float32)
    h = jnp.maximum(h + b1_ref[...], 0.0)          # bias + ReLU in f32

    # Layer 2: (H/2, H) @ (H, TILE_B)
    h = jnp.dot(w2_ref[...], h.astype(mm_dtype),
                preferred_element_type=jnp.float32)
    h = jnp.maximum(h + b2_ref[...], 0.0)

    # Layer 3: (H/4, H/2) @ (H/2, TILE_B)
    h = jnp.dot(w3_ref[...], h.astype(mm_dtype),
                preferred_element_type=jnp.float32)
    h = jnp.maximum(h + b3_ref[...], 0.0)

    # Layer 4 (value head, 1 output): VPU broadcast-multiply + sublane reduce
    # (XLU), all in f32 (no bf16 VALU on v5e). Output stays lane-dense.
    v = (jnp.sum(w4t_ref[...].astype(jnp.float32) * h, axis=0, keepdims=True)
         + b4_ref[...])
    o_ref[...] = v.astype(o_ref.dtype)


def _pick_tile_b(b_pad, max_tile_b):
    """Largest 128-multiple divisor of b_pad that is <= max_tile_b, preferring
    >= 2 grid steps when the batch permits (v7x: 2 TensorCores share the
    'parallel' grid axis; a single-step grid leaves one TC idle)."""
    m = b_pad // 128
    max_d = max(1, min(m, max(1, max_tile_b // 128)))
    divs = [d for d in range(1, max_d + 1) if m % d == 0]
    best = divs[-1]
    if best == m and m >= 2:
        smaller = [d for d in divs if d < m]
        if smaller:
            best = smaller[-1]
    return best * 128


def _vmem_limit_bytes(tile_b, S, H, H2, H4, use_bf16, state_transposed):
    """Rough per-step VMEM footprint; return a limit only if it exceeds the
    default 32 MiB scoped budget (capped at 64 MiB, safe on every generation)."""
    lane = lambda n: _round_up(n, 128)
    sub = lambda n: _round_up(n, 8)
    f32 = 4
    mm = 2 if use_bf16 else 4
    x_buf = (sub(S) * lane(tile_b) if state_transposed
             else sub(tile_b) * lane(S)) * f32
    est = 2 * x_buf                                            # x double-buffer
    est += 2 * sub(1) * lane(tile_b) * f32                     # out double-buffer
    est += 2 * (sub(H) * lane(S) + sub(H2) * lane(H)
                + sub(H4) * lane(H2) + sub(H4) * lane(1)) * mm  # resident weights
    est += 2 * (sub(H) + sub(H2) + sub(H4) + sub(1)) * lane(1) * f32   # biases
    est += (sub(H) + sub(H2) + sub(H4)) * lane(tile_b) * f32   # f32 h intermediates
    est += (x_buf // f32) * mm + (sub(H) + sub(H2)) * lane(tile_b) * mm  # mm copies
    default_scoped = 32 << 20
    if est <= default_scoped - (4 << 20):
        return None
    return min(est + (8 << 20), 64 << 20)


def value_network_forward(state, params, *, max_tile_b=8192, use_bf16=True,
                          transpose_state_in_wrapper=False):
    """state: (B, state_dim) f32. params: w_i (out, in), b_i (out, 1).

    use_bf16: bf16 matmul operands with f32 accumulation (v6e/v7x MXU rate);
    small precision tradeoff, usually negligible for a value head.
    transpose_state_in_wrapper: feed the kernel an (S, B) layout (native
    layer-1 dot, no lane-padding of the x buffer); only worth it if XLA can
    fuse the transpose into the producer of `state`.
    """
    B, S = state.shape

    w1, b1 = params["w1"], params["b1"]
    w2, b2 = params["w2"], params["b2"]
    w3, b3 = params["w3"], params["b3"]
    w4, b4 = params["w4"], params["b4"]
    H, H2, H4 = w1.shape[0], w2.shape[0], w3.shape[0]

    mm_dtype = jnp.bfloat16 if use_bf16 else jnp.float32
    # Host-side, once: cast matmul weights; biases stay f32 (bias + ReLU run on
    # the f32 MXU accumulator output).
    w1c, w2c, w3c = (w.astype(mm_dtype) for w in (w1, w2, w3))
    w4t = w4.T.astype(mm_dtype)                      # (H4, 1)
    b1c, b2c, b3c, b4c = (b.astype(jnp.float32) for b in (b1, b2, b3, b4))

    # Pad the batch only up to a multiple of 128 (<= 127 extra rows), not up to
    # a multiple of tile_b. Padded rows produce garbage values (ReLU(b) chains)
    # but are sliced off below.
    b_pad = _round_up(B, 128)
    if b_pad != B:
        state = jnp.pad(state, ((0, b_pad - B), (0, 0)))
    tile_b = _pick_tile_b(b_pad, max_tile_b)
    grid = (b_pad // tile_b,)

    if transpose_state_in_wrapper:
        x_in = state.T                                   # (S, b_pad)
        x_spec = pl.BlockSpec((S, tile_b), lambda i: (0, i))
    else:
        x_in = state                                     # (b_pad, S)
        x_spec = pl.BlockSpec((tile_b, S), lambda i: (i, 0))

    def const_spec(shape):
        # Full-array block, constant index_map -> resident in VMEM, no re-DMA.
        return pl.BlockSpec(shape, lambda i: (0, 0))

    flops = 2 * b_pad * (S * H + H * H2 + H2 * H4 + H4 * 1)
    w_bytes = sum(int(p.size) * p.dtype.itemsize
                  for p in (w1c, b1c, w2c, b2c, w3c, b3c, w4t, b4c))
    bytes_accessed = int(b_pad * S * 4 + b_pad * 4 + w_bytes)

    out = pl.pallas_call(
        functools.partial(value_net_kernel,
                          state_transposed=transpose_state_in_wrapper),
        out_shape=jax.ShapeDtypeStruct((1, b_pad), jnp.float32),
        grid=grid,
        in_specs=[
            x_spec,
            const_spec(w1c.shape), const_spec(b1c.shape),
            const_spec(w2c.shape), const_spec(b2c.shape),
            const_spec(w3c.shape), const_spec(b3c.shape),
            const_spec(w4t.shape), const_spec(b4c.shape),
        ],
        out_specs=pl.BlockSpec((1, tile_b), lambda i: (0, i)),   # lane-dense
        compiler_params=pltpu.CompilerParams(
            dimension_semantics=("parallel",),
            vmem_limit_bytes=_vmem_limit_bytes(
                tile_b, S, H, H2, H4, use_bf16, transpose_state_in_wrapper)),
        cost_estimate=pl.CostEstimate(
            flops=flops, transcendentals=0, bytes_accessed=bytes_accessed),
    )(x_in, w1c, b1c, w2c, b2c, w3c, b3c, w4t, b4c)

    return out[:, :B].T  # (B, 1), matches the PyTorch module


def init_params(key, state_dim, hidden_dim=128):
    """PyTorch-style (uniform +-1/sqrt(fan_in)) init; weights (out, in)."""
    dims = [state_dim, hidden_dim, hidden_dim // 2, hidden_dim // 4, 1]
    params = {}
    keys = jax.random.split(key, len(dims) - 1)
    for i, (fan_in, fan_out) in enumerate(zip(dims[:-1], dims[1:]), start=1):
        kw, kb = jax.random.split(keys[i - 1])
        bound = 1.0 / jnp.sqrt(fan_in)
        params[f"w{i}"] = jax.random.uniform(
            kw, (fan_out, fan_in), jnp.float32, -bound, bound)
        params[f"b{i}"] = jax.random.uniform(
            kb, (fan_out, 1), jnp.float32, -bound, bound)
    return params


if __name__ == "__main__":
    key = jax.random.PRNGKey(0)
    k_param, k_state = jax.random.split(key)

    batch = 8
    state_dim = 32
    hidden_dim = 32  # small hidden size; layer widths 32 -> 16 -> 8 -> 1

    params = init_params(k_param, state_dim, hidden_dim)
    state = jax.random.normal(k_state, (batch, state_dim), jnp.float32)

    # Plain-JAX reference (weights are (out, in), biases (out, 1)).
    h = state
    for i in range(1, 4):
        h = jnp.maximum(h @ params[f"w{i}"].T + params[f"b{i}"].T, 0.0)
    ref = h @ params["w4"].T + params["b4"].T

    # 1) f32 matmul path, natural (B, S) layout: bit-tight check.
    v_f32 = jax.block_until_ready(
        value_network_forward(state, params, use_bf16=False))
    assert v_f32.shape == (batch, 1)
    assert jnp.allclose(v_f32, ref, atol=1e-5, rtol=1e-5)

    # 2) bf16-matmul path (f32 accumulation): looser tolerance, per review.
    v_bf16 = jax.block_until_ready(
        value_network_forward(state, params, use_bf16=True))
    assert v_bf16.shape == (batch, 1)
    assert jnp.allclose(v_bf16, ref, atol=5e-2, rtol=5e-2)

    # 3) (S, B) input-layout path (native layer-1 dot, no transposed-RHS).
    v_t = jax.block_until_ready(
        value_network_forward(state, params, use_bf16=True,
                              transpose_state_in_wrapper=True))
    assert v_t.shape == (batch, 1)
    assert jnp.allclose(v_t, ref, atol=5e-2, rtol=5e-2)

    print("KERNEL_OK")
</pallas_src>

<mosaic_0001>
module attributes {stable_mosaic.version = 11 : i64} {
  func.func @value_net_kernel(%arg0: i32, %arg1: memref<128x32xf32, #tpu.memory_space<vmem>>, %arg2: memref<32x32xf32, #tpu.memory_space<vmem>>, %arg3: memref<32x1xf32, #tpu.memory_space<vmem>>, %arg4: memref<16x32xf32, #tpu.memory_space<vmem>>, %arg5: memref<16x1xf32, #tpu.memory_space<vmem>>, %arg6: memref<8x16xf32, #tpu.memory_space<vmem>>, %arg7: memref<8x1xf32, #tpu.memory_space<vmem>>, %arg8: memref<8x1xf32, #tpu.memory_space<vmem>>, %arg9: memref<1x1xf32, #tpu.memory_space<vmem>>, %arg10: memref<1x128xf32, #tpu.memory_space<vmem>>) attributes {dimension_semantics = [#tpu.dimension_semantics<parallel>], iteration_bounds = array<i64: 1>, scalar_prefetch = 0 : i64, scratch_operands = 0 : i64, tpu.core_type = #tpu.core_type<tc>, window_params = [{transform_indices = @transform_0, window_bounds = array<i64: 128, 32>}, {pipeline_mode = #tpu.pipeline_mode<synchronous>, transform_indices = @transform_1, window_bounds = array<i64: 32, 32>}, {pipeline_mode = #tpu.pipeline_mode<synchronous>, transform_indices = @transform_2, window_bounds = array<i64: 32, 1>}, {pipeline_mode = #tpu.pipeline_mode<synchronous>, transform_indices = @transform_3, window_bounds = array<i64: 16, 32>}, {pipeline_mode = #tpu.pipeline_mode<synchronous>, transform_indices = @transform_4, window_bounds = array<i64: 16, 1>}, {pipeline_mode = #tpu.pipeline_mode<synchronous>, transform_indices = @transform_5, window_bounds = array<i64: 8, 16>}, {pipeline_mode = #tpu.pipeline_mode<synchronous>, transform_indices = @transform_6, window_bounds = array<i64: 8, 1>}, {pipeline_mode = #tpu.pipeline_mode<synchronous>, transform_indices = @transform_7, window_bounds = array<i64: 8, 1>}, {pipeline_mode = #tpu.pipeline_mode<synchronous>, transform_indices = @transform_8, window_bounds = array<i64: 1, 1>}, {transform_indices = @transform_9, window_bounds = array<i64: 1, 128>}]} {
    %c0 = arith.constant 0 : index
    %c0_0 = arith.constant 0 : index
    %0 = vector.load %arg1[%c0, %c0_0] : memref<128x32xf32, #tpu.memory_space<vmem>>, vector<128x32xf32>
    %c0_1 = arith.constant 0 : index
    %c0_2 = arith.constant 0 : index
    %1 = vector.load %arg2[%c0_1, %c0_2] : memref<32x32xf32, #tpu.memory_space<vmem>>, vector<32x32xf32>
    %cst = arith.constant dense<0.000000e+00> : vector<32x128xf32>
    %2 = tpu.matmul %1, %0, %cst {dimension_numbers = #tpu.dot_dimension_numbers<[1], [1], [0], [0], [0, 0, 1, 0], [], []>} : vector<32x32xf32>, vector<128x32xf32>, vector<32x128xf32> -> vector<32x128xf32>
    %c0_3 = arith.constant 0 : index
    %c0_4 = arith.constant 0 : index
    %3 = vector.load %arg3[%c0_3, %c0_4] : memref<32x1xf32, #tpu.memory_space<vmem>>, vector<32x1xf32>
    %4 = vector.broadcast %3 : vector<32x1xf32> to vector<32x128xf32>
    %5 = arith.addf %2, %4 : vector<32x128xf32>
    %cst_5 = arith.constant 0.000000e+00 : f32
    %6 = vector.broadcast %cst_5 : f32 to vector<32x128xf32>
    %7 = arith.maximumf %5, %6 : vector<32x128xf32>
    %c0_6 = arith.constant 0 : index
    %c0_7 = arith.constant 0 : index
    %8 = vector.load %arg4[%c0_6, %c0_7] : memref<16x32xf32, #tpu.memory_space<vmem>>, vector<16x32xf32>
    %cst_8 = arith.constant dense<0.000000e+00> : vector<16x128xf32>
    %9 = tpu.matmul %8, %7, %cst_8 {dimension_numbers = #tpu.dot_dimension_numbers<[1], [0], [0], [1], [0, 0, 1, 1], [], []>} : vector<16x32xf32>, vector<32x128xf32>, vector<16x128xf32> -> vector<16x128xf32>
    %c0_9 = arith.constant 0 : index
    %c0_10 = arith.constant 0 : index
    %10 = vector.load %arg5[%c0_9, %c0_10] : memref<16x1xf32, #tpu.memory_space<vmem>>, vector<16x1xf32>
    %11 = vector.broadcast %10 : vector<16x1xf32> to vector<16x128xf32>
    %12 = arith.addf %9, %11 : vector<16x128xf32>
    %cst_11 = arith.constant 0.000000e+00 : f32
    %13 = vector.broadcast %cst_11 : f32 to vector<16x128xf32>
    %14 = arith.maximumf %12, %13 : vector<16x128xf32>
    %c0_12 = arith.constant 0 : index
    %c0_13 = arith.constant 0 : index
    %15 = vector.load %arg6[%c0_12, %c0_13] : memref<8x16xf32, #tpu.memory_space<vmem>>, vector<8x16xf32>
    %cst_14 = arith.constant dense<0.000000e+00> : vector<8x128xf32>
    %16 = tpu.matmul %15, %14, %cst_14 {dimension_numbers = #tpu.dot_dimension_numbers<[1], [0], [0], [1], [0, 0, 1, 1], [], []>} : vector<8x16xf32>, vector<16x128xf32>, vector<8x128xf32> -> vector<8x128xf32>
    %c0_15 = arith.constant 0 : index
    %c0_16 = arith.constant 0 : index
    %17 = vector.load %arg7[%c0_15, %c0_16] : memref<8x1xf32, #tpu.memory_space<vmem>>, vector<8x1xf32>
    %18 = vector.broadcast %17 : vector<8x1xf32> to vector<8x128xf32>
    %19 = arith.addf %16, %18 : vector<8x128xf32>
    %cst_17 = arith.constant 0.000000e+00 : f32
    %20 = vector.broadcast %cst_17 : f32 to vector<8x128xf32>
    %21 = arith.maximumf %19, %20 : vector<8x128xf32>
    %c0_18 = arith.constant 0 : index
    %c0_19 = arith.constant 0 : index
    %22 = vector.load %arg8[%c0_18, %c0_19] : memref<8x1xf32, #tpu.memory_space<vmem>>, vector<8x1xf32>
    %23 = vector.broadcast %22 : vector<8x1xf32> to vector<8x128xf32>
    %24 = arith.mulf %23, %21 : vector<8x128xf32>
    %cst_20 = arith.constant dense<0.000000e+00> : vector<128xf32>
    %25 = vector.multi_reduction <add>, %24, %cst_20 [0] : vector<8x128xf32> to vector<128xf32>
    %26 = vector.shape_cast %25 : vector<128xf32> to vector<1x128xf32>
    %c0_21 = arith.constant 0 : index
    %c0_22 = arith.constant 0 : index
    %27 = vector.load %arg9[%c0_21, %c0_22] : memref<1x1xf32, #tpu.memory_space<vmem>>, vector<1x1xf32>
    %28 = vector.broadcast %27 : vector<1x1xf32> to vector<1x128xf32>
    %29 = arith.addf %26, %28 : vector<1x128xf32>
    %c0_23 = arith.constant 0 : index
    %c0_24 = arith.constant 0 : index
    %30 = vector.load %arg10[%c0_23, %c0_24] : memref<1x128xf32, #tpu.memory_space<vmem>>, vector<1x128xf32>
    tpu.vector_store %arg10[%c0_23, %c0_24], %29 {strides = array<i32>} : memref<1x128xf32, #tpu.memory_space<vmem>>, vector<1x128xf32>,
    return
  }
  func.func @transform_0(%arg0: i32) -> (i32, i32) {
    %c0_i32 = arith.constant 0 : i32
    %c0_i32_0 = arith.constant 0 : i32
    return %arg0, %c0_i32 : i32, i32
  }
  func.func @transform_1(%arg0: i32) -> (i32, i32) {
    %c0_i32 = arith.constant 0 : i32
    %c0_i32_0 = arith.constant 0 : i32
    %c0_i32_1 = arith.constant 0 : i32
    return %c0_i32, %c0_i32_0 : i32, i32
  }
  func.func @transform_2(%arg0: i32) -> (i32, i32) {
    %c0_i32 = arith.constant 0 : i32
    %c0_i32_0 = arith.constant 0 : i32
    %c0_i32_1 = arith.constant 0 : i32
    return %c0_i32, %c0_i32_0 : i32, i32
  }
  func.func @transform_3(%arg0: i32) -> (i32, i32) {
    %c0_i32 = arith.constant 0 : i32
    %c0_i32_0 = arith.constant 0 : i32
    %c0_i32_1 = arith.constant 0 : i32
    return %c0_i32, %c0_i32_0 : i32, i32
  }
  func.func @transform_4(%arg0: i32) -> (i32, i32) {
    %c0_i32 = arith.constant 0 : i32
    %c0_i32_0 = arith.constant 0 : i32
    %c0_i32_1 = arith.constant 0 : i32
    return %c0_i32, %c0_i32_0 : i32, i32
  }
  func.func @transform_5(%arg0: i32) -> (i32, i32) {
    %c0_i32 = arith.constant 0 : i32
    %c0_i32_0 = arith.constant 0 : i32
    %c0_i32_1 = arith.constant 0 : i32
    return %c0_i32, %c0_i32_0 : i32, i32
  }
  func.func @transform_6(%arg0: i32) -> (i32, i32) {
    %c0_i32 = arith.constant 0 : i32
    %c0_i32_0 = arith.constant 0 : i32
    %c0_i32_1 = arith.constant 0 : i32
    return %c0_i32, %c0_i32_0 : i32, i32
  }
  func.func @transform_7(%arg0: i32) -> (i32, i32) {
    %c0_i32 = arith.constant 0 : i32
    %c0_i32_0 = arith.constant 0 : i32
    %c0_i32_1 = arith.constant 0 : i32
    return %c0_i32, %c0_i32_0 : i32, i32
  }
  func.func @transform_8(%arg0: i32) -> (i32, i32) {
    %c0_i32 = arith.constant 0 : i32
    %c0_i32_0 = arith.constant 0 : i32
    %c0_i32_1 = arith.constant 0 : i32
    return %c0_i32, %c0_i32_0 : i32, i32
  }
  func.func @transform_9(%arg0: i32) -> (i32, i32) {
    %c0_i32 = arith.constant 0 : i32
    %c0_i32_0 = arith.constant 0 : i32
    return %c0_i32, %arg0 : i32, i32
  }
}

</mosaic_0001>

<llo_original>
// kernel: tpu_custom_call.1
$region0: #{tpu_custom_call.1}
  #allocation0 [shape = 'u32[]', space=smem, size = 0x4, offset = 0x4, fixed_abs, tag = 'smem constant byte address 0x4 - core index']
  #allocation1 [shape = 'u32[144,128]{1,0:T(1,128)}', space=vmem, size = 0x12000, scoped, tag = 'internal scratch']
  #allocation2 [shape = 'f32[1,1]{1,0:T(1,128)S(1)}', space=vmem, size = 0x200, scoped, tag = 'scoped memory for tpu_custom_call.1']
  %s0 = inlined_call_operand.vmem [shape: f32[128,32], index: 0, kind: input, shape index: {}]
  %s1 = inlined_call_operand.vmem [shape: f32[32,32], index: 1, kind: input, shape index: {}]
  %s2 = inlined_call_operand.vmem [shape: f32[32,1], index: 2, kind: input, shape index: {}]
  %s3 = inlined_call_operand.vmem [shape: f32[16,32], index: 3, kind: input, shape index: {}]
  %s4 = inlined_call_operand.vmem [shape: f32[16,1], index: 4, kind: input, shape index: {}]
  %s5 = inlined_call_operand.vmem [shape: f32[8,16], index: 5, kind: input, shape index: {}]
  %s6 = inlined_call_operand.vmem [shape: f32[8,1], index: 6, kind: input, shape index: {}]
  %s7 = inlined_call_operand.vmem [shape: f32[8,1], index: 7, kind: input, shape index: {}]
  %s8 = inlined_call_operand.<no memory space> [shape: f32[1,1], index: 8, kind: input, shape index: {}]
  %s9 = inlined_call_operand.hbm [shape: f32[1,128], index: 9, kind: output, shape index: {}]
  %s10 = sld [smem:[#allocation0]]
  $region46: #{tpu_custom_call.1} parent=0
    _
  %s12 = ssub.s32 1, %s10
  %s13 = scalar_select 0, %s12, %s10
  %v14 = vstv %s8
  %15 = vst [vmem:[#allocation2] sm:$0x1] %v14
  $region1: #{tpu_custom_call.1} parent=0
    #allocation3 [shape = 'u8[512]{0}', space=vmem, size = 0x400, scoped, tag = 'output window, operand 0, single buffered']
    #allocation4 [shape = 's32[1]{0}', space=sflag, size = 0x4, scoped, tag = 'scoped memory for tpu_custom_call.1']
    %16 = vsyncpa [#allocation4], 0
    // Predicated region
    $region2: #{tpu_custom_call.1} parent=1 // pred_check
      _
    $region3: #{tpu_custom_call.1} parent=1 // pred_check_branch
      %18 = sbr.rel (0) target = $region5
    $region4: #{tpu_custom_call.1} parent=1 // pred_region
      _
    $region5: #{tpu_custom_call.1} parent=1 // pred_fallthru
      _
    // Predicated region
    $region6: #{tpu_custom_call.1} parent=1 // pred_check
      _
    $region7: #{tpu_custom_call.1} parent=1 // pred_check_branch
      %20 = sbr.rel (0) target = $region9
    $region8: #{tpu_custom_call.1} parent=1 // pred_region
      _
    $region9: #{tpu_custom_call.1} parent=1 // pred_fallthru
      _
    // Predicated region
    $region10: #{tpu_custom_call.1} parent=1 // pred_check
      _
    $region11: #{tpu_custom_call.1} parent=1 // pred_check_branch
      %22 = sbr.rel (0) target = $region13
    $region12: #{tpu_custom_call.1} parent=1 // pred_region
      _
    $region13: #{tpu_custom_call.1} parent=1 // pred_fallthru
      _
    // Predicated region
    $region14: #{tpu_custom_call.1} parent=1 // pred_check
      _
    $region15: #{tpu_custom_call.1} parent=1 // pred_check_branch
      %24 = sbr.rel (0) target = $region17
    $region16: #{tpu_custom_call.1} parent=1 // pred_region
      _
    $region17: #{tpu_custom_call.1} parent=1 // pred_fallthru
      _
    // Predicated region
    $region18: #{tpu_custom_call.1} parent=1 // pred_check
      _
    $region19: #{tpu_custom_call.1} parent=1 // pred_check_branch
      %26 = sbr.rel (0) target = $region21
    $region20: #{tpu_custom_call.1} parent=1 // pred_region
      _
    $region21: #{tpu_custom_call.1} parent=1 // pred_fallthru
      _
    // Predicated region
    $region22: #{tpu_custom_call.1} parent=1 // pred_check
      _
    $region23: #{tpu_custom_call.1} parent=1 // pred_check_branch
      %28 = sbr.rel (0) target = $region25
    $region24: #{tpu_custom_call.1} parent=1 // pred_region
      _
    $region25: #{tpu_custom_call.1} parent=1 // pred_fallthru
      _
    // Predicated region
    $region26: #{tpu_custom_call.1} parent=1 // pred_check
      _
    $region27: #{tpu_custom_call.1} parent=1 // pred_check_branch
      %30 = sbr.rel (0) target = $region29
    $region28: #{tpu_custom_call.1} parent=1 // pred_region
      _
    $region29: #{tpu_custom_call.1} parent=1 // pred_fallthru
      _
    // Predicated region
    $region30: #{tpu_custom_call.1} parent=1 // pred_check
      _
    $region31: #{tpu_custom_call.1} parent=1 // pred_check_branch
      %32 = sbr.rel (0) target = $region33
    $region32: #{tpu_custom_call.1} parent=1 // pred_region
      _
    $region33: #{tpu_custom_call.1} parent=1 // pred_fallthru
      _
    // Predicated region
    $region34: #{tpu_custom_call.1} parent=1 // pred_check
      _
    $region35: #{tpu_custom_call.1} parent=1 // pred_check_branch
      %34 = sbr.rel (0) target = $region37
    $region36: #{tpu_custom_call.1} parent=1 // pred_region
      _
    $region37: #{tpu_custom_call.1} parent=1 // pred_fallthru
      _
    %v35 = vld [vmem:[%s0] sm:$0xff]
    %v36 = vld [vmem:[%s0 + $0x8] sm:$0xff]
    %v37 = vld [vmem:[%s0 + $0x10] sm:$0xff]
    %v38 = vld [vmem:[%s0 + $0x18] sm:$0xff]
    %v39 = vld [vmem:[%s0 + $0x20] sm:$0xff]
    %v40 = vld [vmem:[%s0 + $0x28] sm:$0xff]
    %v41 = vld [vmem:[%s0 + $0x30] sm:$0xff]
    %v42 = vld [vmem:[%s0 + $0x38] sm:$0xff]
    %v43 = vld [vmem:[%s0 + $0x40] sm:$0xff]
    %v44 = vld [vmem:[%s0 + $0x48] sm:$0xff]
    %v45 = vld [vmem:[%s0 + $0x50] sm:$0xff]
    %v46 = vld [vmem:[%s0 + $0x58] sm:$0xff]
    %v47 = vld [vmem:[%s0 + $0x60] sm:$0xff]
    %v48 = vld [vmem:[%s0 + $0x68] sm:$0xff]
    %v49 = vld [vmem:[%s0 + $0x70] sm:$0xff]
    %v50 = vld [vmem:[%s0 + $0x78] sm:$0xff]
    %v51 = vld [vmem:[%s1] sm:$0xff]
    %v52 = vld [vmem:[%s1 + $0x8] sm:$0xff]
    %v53 = vld [vmem:[%s1 + $0x10] sm:$0xff]
    %v54 = vld [vmem:[%s1 + $0x18] sm:$0xff]
    %v55 = vld [vmem:[%s2] sm:$0xff]
    %v56 = vld [vmem:[%s2 + $0x8] sm:$0xff]
    %v57 = vld [vmem:[%s2 + $0x10] sm:$0xff]
    %v58 = vld [vmem:[%s2 + $0x18] sm:$0xff]
    %60 = vset.pattern.permute.xlu0 0
    %61 = vperm.xlu0 %60, %v55
    %v62 = vpop.permute.xlu0 %61
    %65 = vset.pattern.permute.xlu0 0
    %66 = vperm.xlu0 %65, %v56
    %v67 = vpop.permute.xlu0 %66
    %70 = vset.pattern.permute.xlu0 0
    %71 = vperm.xlu0 %70, %v57
    %v72 = vpop.permute.xlu0 %71
    %75 = vset.pattern.permute.xlu0 0
    %76 = vperm.xlu0 %75, %v58
    %v77 = vpop.permute.xlu0 %76
    %vm79 = vcmask 261120
    %v81 = vsel %vm79, %v51, 0
    %v84 = vsel %vm79, %v52, 0
    %v87 = vsel %vm79, %v53, 0
    %v90 = vsel %vm79, %v54, 0
    %v93 = vsel %vm79, %v35, 0
    %v96 = vsel %vm79, %v36, 0
    %v99 = vsel %vm79, %v37, 0
    %v102 = vsel %vm79, %v38, 0
    %v105 = vsel %vm79, %v39, 0
    %v108 = vsel %vm79, %v40, 0
    %v111 = vsel %vm79, %v41, 0
    %v114 = vsel %vm79, %v42, 0
    %v117 = vsel %vm79, %v43, 0
    %v120 = vsel %vm79, %v44, 0
    %v123 = vsel %vm79, %v45, 0
    %v126 = vsel %vm79, %v46, 0
    %v129 = vsel %vm79, %v47, 0
    %v132 = vsel %vm79, %v48, 0
    %v135 = vsel %vm79, %v49, 0
    %v138 = vsel %vm79, %v50, 0
    %140 = vmatprep.subr.mxu0 0.0
    %141 = vmatpush1.xpose.msra.mxu0 %v93
    %142 = vmatprep.subr.mxu0 0.0
    %143 = vmatpush1.xpose.msra.mxu0 %v96
    %144 = vmatprep.subr.mxu0 0.0
    %145 = vmatpush1.xpose.msra.mxu0 %v99
    %146 = vmatprep.subr.mxu0 0.0
    %147 = vmatpush1.xpose.msra.mxu0 %v102
    %148 = vmatprep.subr.mxu0 0.0
    %149 = vmatpush1.xpose.msra.mxu0 %v105
    %150 = vmatprep.subr.mxu0 0.0
    %151 = vmatpush1.xpose.msra.mxu0 %v108
    %152 = vmatprep.subr.mxu0 0.0
    %153 = vmatpush1.xpose.msra.mxu0 %v111
    %154 = vmatprep.subr.mxu0 0.0
    %155 = vmatpush1.xpose.msra.mxu0 %v114
    %156 = vmatprep.subr.mxu0 0.0
    %157 = vmatpush1.xpose.msra.mxu0 %v117
    %158 = vmatprep.subr.mxu0 0.0
    %159 = vmatpush1.xpose.msra.mxu0 %v120
    %160 = vmatprep.subr.mxu0 0.0
    %161 = vmatpush1.xpose.msra.mxu0 %v123
    %162 = vmatprep.subr.mxu0 0.0
    %163 = vmatpush1.xpose.msra.mxu0 %v126
    %164 = vmatprep.subr.mxu0 0.0
    %165 = vmatpush1.xpose.msra.mxu0 %v129
    %166 = vmatprep.subr.mxu0 0.0
    %167 = vmatpush1.xpose.msra.mxu0 %v132
    %168 = vmatprep.subr.mxu0 0.0
    %169 = vmatpush1.xpose.msra.mxu0 %v135
    %170 = vmatprep.subr.mxu0 0.0
    %171 = vmatpush1.xpose.msra.mxu0 %v138
    %172 = vmatprep.subr.mxu0 0.0
    %173 = vmatpush1.xpose.msra.mxu0 0.0
    %174 = vmatprep.subr.mxu0 0.0
    %175 = vmatpush1.xpose.msra.mxu0 0.0
    %176 = vmatprep.subr.mxu0 0.0
    %177 = vmatpush1.xpose.msra.mxu0 0.0
    %178 = vmatprep.subr.mxu0 0.0
    %179 = vmatpush1.xpose.msra.mxu0 0.0
    %180 = vmatprep.subr.mxu0 0.0
    %181 = vmatpush1.xpose.msra.mxu0 0.0
    %182 = vmatprep.subr.mxu0 0.0
    %183 = vmatpush1.xpose.msra.mxu0 0.0
    %184 = vmatprep.subr.mxu0 0.0
    %185 = vmatpush1.xpose.msra.mxu0 0.0
    %186 = vmatprep.subr.mxu0 0.0
    %187 = vmatpush1.xpose.msra.mxu0 0.0
    %188 = vmatprep.subr.mxu0 0.0
    %189 = vmatpush1.xpose.msra.mxu0 0.0
    %190 = vmatprep.subr.mxu0 0.0
    %191 = vmatpush1.xpose.msra.mxu0 0.0
    %192 = vmatprep.subr.mxu0 0.0
    %193 = vmatpush1.xpose.msra.mxu0 0.0
    %194 = vmatprep.subr.mxu0 0.0
    %195 = vmatpush1.xpose.msra.mxu0 0.0
    %196 = vmatprep.subr.mxu0 0.0
    %197 = vmatpush1.xpose.msra.mxu0 0.0
    %198 = vmatprep.subr.mxu0 0.0
    %199 = vmatpush1.xpose.msra.mxu0 0.0
    %200 = vmatprep.subr.mxu0 0.0
    %201 = vmatpush1.xpose.msra.mxu0 0.0
    %202 = vmatprep.subr.mxu0 0.0
    %203 = vmatpush1.xpose.msra.mxu0 0.0
    %204 = vmatprep.mubr.f32.mxu0 0.0
    %205 = vmatmul.mubr.f32.gmra.mrb[0].mxu0 %v81
    %v206 = vpop.f32.mrb[0].mxu0
    %v207 = vadd.f32 %v62, %v206
    %v208 = vpop.f32.mrb[0].mxu0
    %209 = vmatprep.mubr.f32.mxu0 0.0
    %210 = vmatmul.mubr.f32.gmra.mrb[0].mxu0 %v84
    %v211 = vpop.f32.mrb[0].mxu0
    %v212 = vadd.f32 %v67, %v211
    %v213 = vpop.f32.mrb[0].mxu0
    %214 = vmatprep.mubr.f32.mxu0 0.0
    %215 = vmatmul.mubr.f32.gmra.mrb[0].mxu0 %v87
    %v216 = vpop.f32.mrb[0].mxu0
    %v217 = vadd.f32 %v72, %v216
    %v218 = vpop.f32.mrb[0].mxu0
    %219 = vmatprep.mubr.f32.mxu0 0.0
    %220 = vmatmul.mubr.f32.gmra.mrb[0].mxu0 %v90
    %v221 = vpop.f32.mrb[0].mxu0
    %v222 = vadd.f32 %v77, %v221
    %v223 = vpop.f32.mrb[0].mxu0
    %224 = vdwg.mxu0
    %v225 = vmax.f32 %v207, 0.0
    %v226 = vmax.f32 %v212, 0.0
    %v227 = vmax.f32 %v217, 0.0
    %v228 = vmax.f32 %v222, 0.0
    %v229 = vld [vmem:[%s3] sm:$0xff]
    %v230 = vld [vmem:[%s3 + $0x8] sm:$0xff]
    %v231 = vld [vmem:[%s4] sm:$0xff]
    %v232 = vld [vmem:[%s4 + $0x8] sm:$0xff]
    %234 = vset.pattern.permute.xlu0 0
    %235 = vperm.xlu0 %234, %v231
    %v236 = vpop.permute.xlu0 %235
    %239 = vset.pattern.permute.xlu0 0
    %240 = vperm.xlu0 %239, %v232
    %v241 = vpop.permute.xlu0 %240
    %v244 = vsel %vm79, %v229, 0
    %v247 = vsel %vm79, %v230, 0
    %249 = vmatprep.subr.mxu0 0.0
    %250 = vmatpush1.msra.mxu0 %v225
    %251 = vmatprep.subr.mxu0 0.0
    %252 = vmatpush1.msra.mxu0 %v226
    %253 = vmatprep.subr.mxu0 0.0
    %254 = vmatpush1.msra.mxu0 %v227
    %255 = vmatprep.subr.mxu0 0.0
    %256 = vmatpush1.msra.mxu0 %v228
    %257 = vmatprep.subr.mxu0 0.0
    %258 = vmatpush1.msra.mxu0 0.0
    %259 = vmatprep.subr.mxu0 0.0
    %260 = vmatpush1.msra.mxu0 0.0
    %261 = vmatprep.subr.mxu0 0.0
    %262 = vmatpush1.msra.mxu0 0.0
    %263 = vmatprep.subr.mxu0 0.0
    %264 = vmatpush1.msra.mxu0 0.0
    %265 = vmatprep.subr.mxu0 0.0
    %266 = vmatpush1.msra.mxu0 0.0
    %267 = vmatprep.subr.mxu0 0.0
    %268 = vmatpush1.msra.mxu0 0.0
    %269 = vmatprep.subr.mxu0 0.0
    %270 = vmatpush1.msra.mxu0 0.0
    %271 = vmatprep.subr.mxu0 0.0
    %272 = vmatpush1.msra.mxu0 0.0
    %273 = vmatprep.subr.mxu0 0.0
    %274 = vmatpush1.msra.mxu0 0.0
    %275 = vmatprep.subr.mxu0 0.0
    %276 = vmatpush1.msra.mxu0 0.0
    %277 = vmatprep.subr.mxu0 0.0
    %278 = vmatpush1.msra.mxu0 0.0
    %279 = vmatprep.subr.mxu0 0.0
    %280 = vmatpush1.msra.mxu0 0.0
    %281 = vmatprep.subr.mxu0 0.0
    %282 = vmatpush1.msra.mxu0 0.0
    %283 = vmatprep.subr.mxu0 0.0
    %284 = vmatpush1.msra.mxu0 0.0
    %285 = vmatprep.subr.mxu0 0.0
    %286 = vmatpush1.msra.mxu0 0.0
    %287 = vmatprep.subr.mxu0 0.0
    %288 = vmatpush1.msra.mxu0 0.0
    %289 = vmatprep.subr.mxu0 0.0
    %290 = vmatpush1.msra.mxu0 0.0
    %291 = vmatprep.subr.mxu0 0.0
    %292 = vmatpush1.msra.mxu0 0.0
    %293 = vmatprep.subr.mxu0 0.0
    %294 = vmatpush1.msra.mxu0 0.0
    %295 = vmatprep.subr.mxu0 0.0
    %296 = vmatpush1.msra.mxu0 0.0
    %297 = vmatprep.subr.mxu0 0.0
    %298 = vmatpush1.msra.mxu0 0.0
    %299 = vmatprep.subr.mxu0 0.0
    %300 = vmatpush1.msra.mxu0 0.0
    %301 = vmatprep.subr.mxu0 0.0
    %302 = vmatpush1.msra.mxu0 0.0
    %303 = vmatprep.subr.mxu0 0.0
    %304 = vmatpush1.msra.mxu0 0.0
    %305 = vmatprep.subr.mxu0 0.0
    %306 = vmatpush1.msra.mxu0 0.0
    %307 = vmatprep.subr.mxu0 0.0
    %308 = vmatpush1.msra.mxu0 0.0
    %309 = vmatprep.subr.mxu0 0.0
    %310 = vmatpush1.msra.mxu0 0.0
    %311 = vmatprep.subr.mxu0 0.0
    %312 = vmatpush1.msra.mxu0 0.0
    %313 = vmatprep.mubr.f32.mxu0 0.0
    %314 = vmatmul.mubr.f32.gmra.mrb[0].mxu0 %v244
    %v315 = vpop.f32.mrb[0].mxu0
    %v316 = vadd.f32 %v236, %v315
    %v317 = vpop.f32.mrb[0].mxu0
    %318 = vmatprep.mubr.f32.mxu0 0.0
    %319 = vmatmul.mubr.f32.gmra.mrb[0].mxu0 %v247
    %v320 = vpop.f32.mrb[0].mxu0
    %v321 = vadd.f32 %v241, %v320
    %v322 = vpop.f32.mrb[0].mxu0
    %323 = vdwg.mxu0
    %v324 = vmax.f32 %v316, 0.0
    %v325 = vmax.f32 %v321, 0.0
    %v326 = vld [vmem:[%s5] sm:$0xff]
    %v327 = vld [vmem:[%s6] sm:$0xff]
    %329 = vset.pattern.permute.xlu0 0
    %330 = vperm.xlu0 %329, %v327
    %v331 = vpop.permute.xlu0 %330
    %vm333 = vcmask 130048
    %v335 = vsel %vm333, %v326, 0
    %337 = vmatprep.subr.mxu0 0.0
    %338 = vmatpush1.msra.mxu0 %v324
    %339 = vmatprep.subr.mxu0 0.0
    %340 = vmatpush1.msra.mxu0 %v325
    %341 = vmatprep.subr.mxu0 0.0
    %342 = vmatpush1.msra.mxu0 0.0
    %343 = vmatprep.subr.mxu0 0.0
    %344 = vmatpush1.msra.mxu0 0.0
    %345 = vmatprep.subr.mxu0 0.0
    %346 = vmatpush1.msra.mxu0 0.0
    %347 = vmatprep.subr.mxu0 0.0
    %348 = vmatpush1.msra.mxu0 0.0
    %349 = vmatprep.subr.mxu0 0.0
    %350 = vmatpush1.msra.mxu0 0.0
    %351 = vmatprep.subr.mxu0 0.0
    %352 = vmatpush1.msra.mxu0 0.0
    %353 = vmatprep.subr.mxu0 0.0
    %354 = vmatpush1.msra.mxu0 0.0
    %355 = vmatprep.subr.mxu0 0.0
    %356 = vmatpush1.msra.mxu0 0.0
    %357 = vmatprep.subr.mxu0 0.0
    %358 = vmatpush1.msra.mxu0 0.0
    %359 = vmatprep.subr.mxu0 0.0
    %360 = vmatpush1.msra.mxu0 0.0
    %361 = vmatprep.subr.mxu0 0.0
    %362 = vmatpush1.msra.mxu0 0.0
    %363 = vmatprep.subr.mxu0 0.0
    %364 = vmatpush1.msra.mxu0 0.0
    %365 = vmatprep.subr.mxu0 0.0
    %366 = vmatpush1.msra.mxu0 0.0
    %367 = vmatprep.subr.mxu0 0.0
    %368 = vmatpush1.msra.mxu0 0.0
    %369 = vmatprep.subr.mxu0 0.0
    %370 = vmatpush1.msra.mxu0 0.0
    %371 = vmatprep.subr.mxu0 0.0
    %372 = vmatpush1.msra.mxu0 0.0
    %373 = vmatprep.subr.mxu0 0.0
    %374 = vmatpush1.msra.mxu0 0.0
    %375 = vmatprep.subr.mxu0 0.0
    %376 = vmatpush1.msra.mxu0 0.0
    %377 = vmatprep.subr.mxu0 0.0
    %378 = vmatpush1.msra.mxu0 0.0
    %379 = vmatprep.subr.mxu0 0.0
    %380 = vmatpush1.msra.mxu0 0.0
    %381 = vmatprep.subr.mxu0 0.0
    %382 = vmatpush1.msra.mxu0 0.0
    %383 = vmatprep.subr.mxu0 0.0
    %384 = vmatpush1.msra.mxu0 0.0
    %385 = vmatprep.subr.mxu0 0.0
    %386 = vmatpush1.msra.mxu0 0.0
    %387 = vmatprep.subr.mxu0 0.0
    %388 = vmatpush1.msra.mxu0 0.0
    %389 = vmatprep.subr.mxu0 0.0
    %390 = vmatpush1.msra.mxu0 0.0
    %391 = vmatprep.subr.mxu0 0.0
    %392 = vmatpush1.msra.mxu0 0.0
    %393 = vmatprep.subr.mxu0 0.0
    %394 = vmatpush1.msra.mxu0 0.0
    %395 = vmatprep.subr.mxu0 0.0
    %396 = vmatpush1.msra.mxu0 0.0
    %397 = vmatprep.subr.mxu0 0.0
    %398 = vmatpush1.msra.mxu0 0.0
    %399 = vmatprep.subr.mxu0 0.0
    %400 = vmatpush1.msra.mxu0 0.0
    %401 = vmatprep.mubr.f32.mxu0 0.0
    %402 = vmatmul.mubr.f32.gmra.mrb[0].mxu0 %v335
    %v403 = vpop.f32.mrb[0].mxu0
    %v404 = vadd.f32 %v331, %v403
    %v405 = vpop.f32.mrb[0].mxu0
    %406 = vdwg.mxu0
    %v407 = vmax.f32 %v404, 0.0
    %v408 = vld [vmem:[%s7] sm:$0xff]
    %410 = vset.pattern.permute.xlu0 0
    %411 = vperm.xlu0 %410, %v408
    %v412 = vpop.permute.xlu0 %411
    %v414 = vmul.f32 %v412, %v407
    %v415 = vrot.slane %v414, 4
    %v416 = vadd.f32 %v414, %v415
    %v417 = vrot.slane %v416, 2
    %v418 = vadd.f32 %v416, %v417
    %v419 = vrot.slane %v418, 1
    %v420 = vadd.f32 %v418, %v419
    %v421 = vld [vmem:[#allocation2] sm:$0x1]
    %423 = vset.pattern.permute.xlu0 0
    %424 = vperm.xlu0 %423, %v421
    %v425 = vpop.permute.xlu0 %424
    %v427 = vlaneseq
    %v428 = vshrl.u32 %v427, 7
    %v429 = vsub.s32 0, %v428
    %v430 = vrot.slane %v425, %v429
    %v431 = vadd.f32 %v420, %v430
    %432 = vst [vmem:[#allocation3] sm:$0x1] %v431
    // Predicated region
    $region38: #{tpu_custom_call.1} parent=1 // pred_check
      _
    $region39: #{tpu_custom_call.1} parent=1 // pred_check_branch
      %434 = sbr.rel (0) target = $region41
    $region40: #{tpu_custom_call.1} parent=1 // pred_region
      %s436 = ssub.s32 16, 16
      %437 = vsyncadd [#allocation4], %s436
      %s439 = sshll.u32 [#allocation3], 4
      %s440 = int_to_ptr.vmem [resolvable:$true] %s439
      %442 = dma.vmem_to_hbm [thread:$0]  %s440, 16, %s9, [#allocation4]
    $region41: #{tpu_custom_call.1} parent=1 // pred_fallthru
      _
    // Predicated region
    $region42: #{tpu_custom_call.1} parent=1 // pred_check
      _
    $region43: #{tpu_custom_call.1} parent=1 // pred_check_branch
      %444 = sbr.rel (0) target = $region45
    $region44: #{tpu_custom_call.1} parent=1 // pred_region
      %445 = dma.done [#allocation4], 16
    $region45: #{tpu_custom_call.1} parent=1 // pred_fallthru
      _
    %446 = vsyncpa [#allocation4], 1

</llo_original>
